<compile_context>
chip_gen: v5e
topology: v5e:2x2
jax: 0.10.0
libtpu: 0.0.40
codegen_flags: <defaults>
</compile_context>

<pallas_src>
import functools

import jax
import jax.numpy as jnp
from jax.experimental import pallas as pl
from jax.experimental.pallas import tpu as pltpu


def _round_up(x, m):
    return ((x + m - 1) // m) * m


def comparison_kernel(enc1_ref, enc2_ref, w1_ref, b1_ref, w2_ref, b2_ref,
                      out_ref, *, compute_dtype):
    # Subtraction in-kernel (VPU); matmul operands optionally bf16; bias add
    # and ReLU on the f32 accumulator path.
    diff = (enc1_ref[...] - enc2_ref[...]).astype(compute_dtype)

    h = jnp.dot(diff, w1_ref[...], preferred_element_type=jnp.float32)
    h = jnp.maximum(h + b1_ref[...], 0.0)

    out = jnp.dot(h.astype(compute_dtype), w2_ref[...],
                  preferred_element_type=jnp.float32) + b2_ref[...]
    out_ref[...] = out.astype(out_ref.dtype)


def prepare_params(w1, b1, w2, b2, *, use_bf16=False):
    """One-time parameter prep (call at module init, NOT per forward).

    Weights are stored pre-transposed as (in, out) in the matmul compute
    dtype; biases as (1, out) float32 rows (added onto the f32 accumulator).
    """
    compute_dtype = jnp.bfloat16 if use_bf16 else jnp.float32
    w1c = w1.astype(compute_dtype)
    w2c = w2.astype(compute_dtype)
    b1c = b1.reshape(1, -1).astype(jnp.float32)
    b2c = b2.reshape(1, -1).astype(jnp.float32)
    return w1c, b1c, w2c, b2c, compute_dtype


def comparison_module(enc1, enc2, w1, b1, w2, b2, *, block_b=2048,
                      compute_dtype=jnp.float32):
    """enc1, enc2: (B, dim_v). w1: (dim_v, 128), b1: (1, 128),
    w2: (128, dim_v), b2: (1, dim_v) — as produced by prepare_params().
    Returns (B, dim_v)."""
    B, dim_v = enc1.shape
    hidden = w1.shape[1]
    assert w1.shape == (dim_v, hidden)
    assert b1.shape == (1, hidden)
    assert w2.shape == (hidden, dim_v)
    assert b2.shape == (1, dim_v)

    # Batch tile: multiple of 8 sublanes, large (mem-bound op -> big tiles
    # amortize the per-grid-step overhead).
    B8 = _round_up(B, 8)
    tb = min(block_b, B8)
    # v7x: keep >= 2 grid steps so both TensorCores share the batch.
    if B8 >= 16 and B8 // tb < 2:
        tb = max(8, (B8 // 2) // 8 * 8)
    B_p = _round_up(B, tb)

    # Pad only the batch axis, and only when needed; production B that is a
    # multiple of tb takes the copy-free path. Feature axis is never padded.
    if B_p != B:
        pad = ((0, B_p - B), (0, 0))
        enc1_in = jnp.pad(enc1, pad)
        enc2_in = jnp.pad(enc2, pad)
    else:
        enc1_in, enc2_in = enc1, enc2

    kernel = functools.partial(comparison_kernel, compute_dtype=compute_dtype)

    out = pl.pallas_call(
        kernel,
        out_shape=jax.ShapeDtypeStruct((B_p, dim_v), enc1.dtype),
        grid=(B_p // tb,),
        in_specs=[
            # Activations stream per grid step (double-buffered by Pallas).
            pl.BlockSpec((tb, dim_v), lambda i: (i, 0)),
            pl.BlockSpec((tb, dim_v), lambda i: (i, 0)),
            # Parameters: constant index_map -> fetched once, VMEM-resident.
            pl.BlockSpec((dim_v, hidden), lambda i: (0, 0)),
            pl.BlockSpec((1, hidden), lambda i: (0, 0)),
            pl.BlockSpec((hidden, dim_v), lambda i: (0, 0)),
            pl.BlockSpec((1, dim_v), lambda i: (0, 0)),
        ],
        out_specs=pl.BlockSpec((tb, dim_v), lambda i: (i, 0)),
        compiler_params=pltpu.CompilerParams(
            dimension_semantics=("parallel",)),
    )(enc1_in, enc2_in, w1, b1, w2, b2)

    return out if B_p == B else out[:B]


def reference(enc1, enc2, w1, b1, w2, b2):
    h = jnp.maximum((enc1 - enc2) @ w1 + b1, 0.0)
    return h @ w2 + b2


if __name__ == "__main__":
    B = 2
    dim_v = 32
    hidden = 128

    key = jax.random.PRNGKey(0)
    k1, k2, k3, k4, k5, k6 = jax.random.split(key, 6)

    enc1 = jax.random.normal(k1, (B, dim_v), dtype=jnp.float32)
    enc2 = jax.random.normal(k2, (B, dim_v), dtype=jnp.float32)

    # PyTorch-style uniform(-1/sqrt(fan_in), +) init; weights stored already
    # transposed as (in, out).
    bound1 = 1.0 / (dim_v ** 0.5)
    bound2 = 1.0 / (hidden ** 0.5)
    w1 = jax.random.uniform(k3, (dim_v, hidden), jnp.float32, -bound1, bound1)
    b1 = jax.random.uniform(k4, (hidden,), jnp.float32, -bound1, bound1)
    w2 = jax.random.uniform(k5, (hidden, dim_v), jnp.float32, -bound2, bound2)
    b2 = jax.random.uniform(k6, (dim_v,), jnp.float32, -bound2, bound2)

    # One-time parameter prep. f32 compute here for tight verification; set
    # use_bf16=True on v6e/v7x when the accuracy budget allows (halves the
    # weight bytes and enables bf16 MXU operands).
    w1p, b1p, w2p, b2p, cdt = prepare_params(w1, b1, w2, b2, use_bf16=False)

    out = comparison_module(enc1, enc2, w1p, b1p, w2p, b2p, compute_dtype=cdt)
    out = jax.block_until_ready(out)

    ref = reference(enc1, enc2, w1, b1.reshape(1, -1), w2, b2.reshape(1, -1))
    assert out.shape == (B, dim_v)
    assert jnp.allclose(out, ref, atol=1e-5, rtol=1e-5), "mismatch vs JAX reference"

    print("KERNEL_OK")
</pallas_src>

<mosaic_0001>
module attributes {stable_mosaic.version = 11 : i64} {
  func.func @comparison_kernel(%arg0: i32, %arg1: memref<8x32xf32, #tpu.memory_space<vmem>>, %arg2: memref<8x32xf32, #tpu.memory_space<vmem>>, %arg3: memref<32x128xf32, #tpu.memory_space<vmem>>, %arg4: memref<1x128xf32, #tpu.memory_space<vmem>>, %arg5: memref<128x32xf32, #tpu.memory_space<vmem>>, %arg6: memref<1x32xf32, #tpu.memory_space<vmem>>, %arg7: memref<8x32xf32, #tpu.memory_space<vmem>>) attributes {dimension_semantics = [#tpu.dimension_semantics<parallel>], iteration_bounds = array<i64: 1>, scalar_prefetch = 0 : i64, scratch_operands = 0 : i64, tpu.core_type = #tpu.core_type<tc>, window_params = [{transform_indices = @transform_0, window_bounds = array<i64: 8, 32>}, {transform_indices = @transform_1, window_bounds = array<i64: 8, 32>}, {pipeline_mode = #tpu.pipeline_mode<synchronous>, transform_indices = @transform_2, window_bounds = array<i64: 32, 128>}, {pipeline_mode = #tpu.pipeline_mode<synchronous>, transform_indices = @transform_3, window_bounds = array<i64: 1, 128>}, {pipeline_mode = #tpu.pipeline_mode<synchronous>, transform_indices = @transform_4, window_bounds = array<i64: 128, 32>}, {pipeline_mode = #tpu.pipeline_mode<synchronous>, transform_indices = @transform_5, window_bounds = array<i64: 1, 32>}, {transform_indices = @transform_6, window_bounds = array<i64: 8, 32>}]} {
    %c0 = arith.constant 0 : index
    %c0_0 = arith.constant 0 : index
    %0 = vector.load %arg1[%c0, %c0_0] : memref<8x32xf32, #tpu.memory_space<vmem>>, vector<8x32xf32>
    %c0_1 = arith.constant 0 : index
    %c0_2 = arith.constant 0 : index
    %1 = vector.load %arg2[%c0_1, %c0_2] : memref<8x32xf32, #tpu.memory_space<vmem>>, vector<8x32xf32>
    %2 = arith.subf %0, %1 : vector<8x32xf32>
    %c0_3 = arith.constant 0 : index
    %c0_4 = arith.constant 0 : index
    %3 = vector.load %arg3[%c0_3, %c0_4] : memref<32x128xf32, #tpu.memory_space<vmem>>, vector<32x128xf32>
    %cst = arith.constant dense<0.000000e+00> : vector<8x128xf32>
    %4 = tpu.matmul %2, %3, %cst {dimension_numbers = #tpu.dot_dimension_numbers<[1], [0], [0], [1], [0, 0, 1, 1], [], []>} : vector<8x32xf32>, vector<32x128xf32>, vector<8x128xf32> -> vector<8x128xf32>
    %c0_5 = arith.constant 0 : index
    %c0_6 = arith.constant 0 : index
    %5 = vector.load %arg4[%c0_5, %c0_6] : memref<1x128xf32, #tpu.memory_space<vmem>>, vector<1x128xf32>
    %6 = vector.broadcast %5 : vector<1x128xf32> to vector<8x128xf32>
    %7 = arith.addf %4, %6 : vector<8x128xf32>
    %cst_7 = arith.constant 0.000000e+00 : f32
    %8 = vector.broadcast %cst_7 : f32 to vector<8x128xf32>
    %9 = arith.maximumf %7, %8 : vector<8x128xf32>
    %c0_8 = arith.constant 0 : index
    %c0_9 = arith.constant 0 : index
    %10 = vector.load %arg5[%c0_8, %c0_9] : memref<128x32xf32, #tpu.memory_space<vmem>>, vector<128x32xf32>
    %cst_10 = arith.constant dense<0.000000e+00> : vector<8x32xf32>
    %11 = tpu.matmul %9, %10, %cst_10 {dimension_numbers = #tpu.dot_dimension_numbers<[1], [0], [0], [1], [0, 0, 1, 1], [], []>} : vector<8x128xf32>, vector<128x32xf32>, vector<8x32xf32> -> vector<8x32xf32>
    %c0_11 = arith.constant 0 : index
    %c0_12 = arith.constant 0 : index
    %12 = vector.load %arg6[%c0_11, %c0_12] : memref<1x32xf32, #tpu.memory_space<vmem>>, vector<1x32xf32>
    %13 = vector.broadcast %12 : vector<1x32xf32> to vector<8x32xf32>
    %14 = arith.addf %11, %13 : vector<8x32xf32>
    %c0_13 = arith.constant 0 : index
    %c0_14 = arith.constant 0 : index
    %15 = vector.load %arg7[%c0_13, %c0_14] : memref<8x32xf32, #tpu.memory_space<vmem>>, vector<8x32xf32>
    tpu.vector_store %arg7[%c0_13, %c0_14], %14 {strides = array<i32>} : memref<8x32xf32, #tpu.memory_space<vmem>>, vector<8x32xf32>,
    return
  }
  func.func @transform_0(%arg0: i32) -> (i32, i32) {
    %c0_i32 = arith.constant 0 : i32
    %c0_i32_0 = arith.constant 0 : i32
    return %arg0, %c0_i32 : i32, i32
  }
  func.func @transform_1(%arg0: i32) -> (i32, i32) {
    %c0_i32 = arith.constant 0 : i32
    %c0_i32_0 = arith.constant 0 : i32
    return %arg0, %c0_i32 : i32, i32
  }
  func.func @transform_2(%arg0: i32) -> (i32, i32) {
    %c0_i32 = arith.constant 0 : i32
    %c0_i32_0 = arith.constant 0 : i32
    %c0_i32_1 = arith.constant 0 : i32
    return %c0_i32, %c0_i32_0 : i32, i32
  }
  func.func @transform_3(%arg0: i32) -> (i32, i32) {
    %c0_i32 = arith.constant 0 : i32
    %c0_i32_0 = arith.constant 0 : i32
    %c0_i32_1 = arith.constant 0 : i32
    return %c0_i32, %c0_i32_0 : i32, i32
  }
  func.func @transform_4(%arg0: i32) -> (i32, i32) {
    %c0_i32 = arith.constant 0 : i32
    %c0_i32_0 = arith.constant 0 : i32
    %c0_i32_1 = arith.constant 0 : i32
    return %c0_i32, %c0_i32_0 : i32, i32
  }
  func.func @transform_5(%arg0: i32) -> (i32, i32) {
    %c0_i32 = arith.constant 0 : i32
    %c0_i32_0 = arith.constant 0 : i32
    %c0_i32_1 = arith.constant 0 : i32
    return %c0_i32, %c0_i32_0 : i32, i32
  }
  func.func @transform_6(%arg0: i32) -> (i32, i32) {
    %c0_i32 = arith.constant 0 : i32
    %c0_i32_0 = arith.constant 0 : i32
    return %arg0, %c0_i32 : i32, i32
  }
}

</mosaic_0001>

<llo_original>
// kernel: tpu_custom_call.1
$region0: #{tpu_custom_call.1}
  #allocation0 [shape = 'u32[]', space=smem, size = 0x4, offset = 0x4, fixed_abs, tag = 'smem constant byte address 0x4 - core index']
  #allocation1 [shape = 'u32[72,128]{1,0:T(1,128)}', space=vmem, size = 0x9000, scoped, tag = 'internal scratch']
  %s0 = inlined_call_operand.vmem [shape: f32[8,32], index: 0, kind: input, shape index: {}]
  %s1 = inlined_call_operand.vmem [shape: f32[8,32], index: 1, kind: input, shape index: {}]
  %s2 = inlined_call_operand.vmem [shape: f32[32,128], index: 2, kind: input, shape index: {}]
  %s3 = inlined_call_operand.vmem [shape: f32[1,128], index: 3, kind: input, shape index: {}]
  %s4 = inlined_call_operand.vmem [shape: f32[128,32], index: 4, kind: input, shape index: {}]
  %s5 = inlined_call_operand.vmem [shape: f32[1,32], index: 5, kind: input, shape index: {}]
  %s6 = inlined_call_operand.hbm [shape: f32[8,32], index: 6, kind: output, shape index: {}]
  %s7 = sld [smem:[#allocation0]]
  $region34: #{tpu_custom_call.1} parent=0
    _
  %s9 = ssub.s32 1, %s7
  %s10 = scalar_select 0, %s9, %s7
  $region1: #{tpu_custom_call.1} parent=0
    #allocation2 [shape = 'u8[4096]{0}', space=vmem, size = 0x1000, scoped, tag = 'output window, operand 0, single buffered']
    #allocation3 [shape = 's32[1]{0}', space=sflag, size = 0x4, scoped, tag = 'scoped memory for tpu_custom_call.1']
    %11 = vsyncpa [#allocation3], 0
    // Predicated region
    $region2: #{tpu_custom_call.1} parent=1 // pred_check
      _
    $region3: #{tpu_custom_call.1} parent=1 // pred_check_branch
      %13 = sbr.rel (0) target = $region5
    $region4: #{tpu_custom_call.1} parent=1 // pred_region
      _
    $region5: #{tpu_custom_call.1} parent=1 // pred_fallthru
      _
    // Predicated region
    $region6: #{tpu_custom_call.1} parent=1 // pred_check
      _
    $region7: #{tpu_custom_call.1} parent=1 // pred_check_branch
      %15 = sbr.rel (0) target = $region9
    $region8: #{tpu_custom_call.1} parent=1 // pred_region
      _
    $region9: #{tpu_custom_call.1} parent=1 // pred_fallthru
      _
    // Predicated region
    $region10: #{tpu_custom_call.1} parent=1 // pred_check
      _
    $region11: #{tpu_custom_call.1} parent=1 // pred_check_branch
      %17 = sbr.rel (0) target = $region13
    $region12: #{tpu_custom_call.1} parent=1 // pred_region
      _
    $region13: #{tpu_custom_call.1} parent=1 // pred_fallthru
      _
    // Predicated region
    $region14: #{tpu_custom_call.1} parent=1 // pred_check
      _
    $region15: #{tpu_custom_call.1} parent=1 // pred_check_branch
      %19 = sbr.rel (0) target = $region17
    $region16: #{tpu_custom_call.1} parent=1 // pred_region
      _
    $region17: #{tpu_custom_call.1} parent=1 // pred_fallthru
      _
    // Predicated region
    $region18: #{tpu_custom_call.1} parent=1 // pred_check
      _
    $region19: #{tpu_custom_call.1} parent=1 // pred_check_branch
      %21 = sbr.rel (0) target = $region21
    $region20: #{tpu_custom_call.1} parent=1 // pred_region
      _
    $region21: #{tpu_custom_call.1} parent=1 // pred_fallthru
      _
    // Predicated region
    $region22: #{tpu_custom_call.1} parent=1 // pred_check
      _
    $region23: #{tpu_custom_call.1} parent=1 // pred_check_branch
      %23 = sbr.rel (0) target = $region25
    $region24: #{tpu_custom_call.1} parent=1 // pred_region
      _
    $region25: #{tpu_custom_call.1} parent=1 // pred_fallthru
      _
    %v24 = vld [vmem:[%s0] sm:$0xff]
    %v25 = vld [vmem:[%s1] sm:$0xff]
    %v26 = vsub.f32 %v24, %v25
    %v27 = vld [vmem:[%s2] sm:$0xff]
    %v28 = vld [vmem:[%s2 + $0x8] sm:$0xff]
    %v29 = vld [vmem:[%s2 + $0x10] sm:$0xff]
    %v30 = vld [vmem:[%s2 + $0x18] sm:$0xff]
    %v31 = vld [vmem:[%s3] sm:$0x1]
    %v33 = vperm.slane %v31, 0
    %vm35 = vcmask 261120
    %v37 = vsel %vm35, %v26, 0
    %39 = vmatpush.msra.mxu0 0.0
    %40 = vmatpush.msra.mxu0 0.0
    %41 = vmatpush.msra.mxu0 0.0
    %42 = vmatpush.msra.mxu0 0.0
    %43 = vmatpush.msra.mxu0 0.0
    %44 = vmatpush.msra.mxu0 0.0
    %45 = vmatpush.msra.mxu0 0.0
    %46 = vmatpush.msra.mxu0 0.0
    %47 = vmatpush.msra.mxu0 0.0
    %48 = vmatpush.msra.mxu0 0.0
    %49 = vmatpush.msra.mxu0 0.0
    %50 = vmatpush.msra.mxu0 0.0
    %51 = vmatpush.msra.mxu0 %v30
    %52 = vmatpush.msra.mxu0 %v29
    %53 = vmatpush.msra.mxu0 %v28
    %54 = vmatpush.msra.mxu0 %v27
    %55 = vmatmul.f32.gmra.mxu0 %v37
    %v56 = vpop.f32.mrf.mxu0
    %v57 = vadd.f32 %v33, %v56
    %58 = vdwg.mxu0
    %v59 = vmax.f32 %v57, 0.0
    %v60 = vld [vmem:[%s4] sm:$0xff]
    %v61 = vld [vmem:[%s4 + $0x8] sm:$0xff]
    %v62 = vld [vmem:[%s4 + $0x10] sm:$0xff]
    %v63 = vld [vmem:[%s4 + $0x18] sm:$0xff]
    %v64 = vld [vmem:[%s4 + $0x20] sm:$0xff]
    %v65 = vld [vmem:[%s4 + $0x28] sm:$0xff]
    %v66 = vld [vmem:[%s4 + $0x30] sm:$0xff]
    %v67 = vld [vmem:[%s4 + $0x38] sm:$0xff]
    %v68 = vld [vmem:[%s4 + $0x40] sm:$0xff]
    %v69 = vld [vmem:[%s4 + $0x48] sm:$0xff]
    %v70 = vld [vmem:[%s4 + $0x50] sm:$0xff]
    %v71 = vld [vmem:[%s4 + $0x58] sm:$0xff]
    %v72 = vld [vmem:[%s4 + $0x60] sm:$0xff]
    %v73 = vld [vmem:[%s4 + $0x68] sm:$0xff]
    %v74 = vld [vmem:[%s4 + $0x70] sm:$0xff]
    %v75 = vld [vmem:[%s4 + $0x78] sm:$0xff]
    %v76 = vld [vmem:[%s5] sm:$0x1]
    %v78 = vperm.slane %v76, 0
    %80 = vmatpush.msra.mxu0 %v75
    %81 = vmatpush.msra.mxu0 %v74
    %82 = vmatpush.msra.mxu0 %v73
    %83 = vmatpush.msra.mxu0 %v72
    %84 = vmatpush.msra.mxu0 %v71
    %85 = vmatpush.msra.mxu0 %v70
    %86 = vmatpush.msra.mxu0 %v69
    %87 = vmatpush.msra.mxu0 %v68
    %88 = vmatpush.msra.mxu0 %v67
    %89 = vmatpush.msra.mxu0 %v66
    %90 = vmatpush.msra.mxu0 %v65
    %91 = vmatpush.msra.mxu0 %v64
    %92 = vmatpush.msra.mxu0 %v63
    %93 = vmatpush.msra.mxu0 %v62
    %94 = vmatpush.msra.mxu0 %v61
    %95 = vmatpush.msra.mxu0 %v60
    %96 = vmatmul.f32.gmra.mxu0 %v59
    %v97 = vpop.f32.mrf.mxu0
    %v98 = vadd.f32 %v78, %v97
    %99 = vdwg.mxu0
    %100 = vst.msk [vmem:[#allocation2] sm:$0xff] %vm35, %v98
    // Predicated region
    $region26: #{tpu_custom_call.1} parent=1 // pred_check
      _
    $region27: #{tpu_custom_call.1} parent=1 // pred_check_branch
      %102 = sbr.rel (0) target = $region29
    $region28: #{tpu_custom_call.1} parent=1 // pred_region
      %104 = vsyncadd [#allocation3], 0
      %s106 = sshll.u32 [#allocation2], 4
      %s107 = int_to_ptr.vmem [resolvable:$true] %s106
      %s108 = sshll.u32 %s6, 4
      %s109 = int_to_ptr.hbm [resolvable:$true] %s108
      %111 = dma.vmem_to_hbm [thread:$0]  %s107, 128, %s109, [#allocation3]
    $region29: #{tpu_custom_call.1} parent=1 // pred_fallthru
      _
    // Predicated region
    $region30: #{tpu_custom_call.1} parent=1 // pred_check
      _
    $region31: #{tpu_custom_call.1} parent=1 // pred_check_branch
      %113 = sbr.rel (0) target = $region33
    $region32: #{tpu_custom_call.1} parent=1 // pred_region
      %115 = dma.done [#allocation3], 128
    $region33: #{tpu_custom_call.1} parent=1 // pred_fallthru
      _
    %116 = vsyncpa [#allocation3], 1

</llo_original>
